<compile_context>
chip_gen: v7x
topology: tpu7x:2x2x1
jax: 0.10.0
libtpu: 0.0.40
codegen_flags: <defaults>
</compile_context>

<pallas_src>
import functools

import jax
import jax.numpy as jnp
from jax.experimental import pallas as pl
from jax.experimental.pallas import tpu as pltpu


def _conv1d_kernel(xm_ref, xh_ref, w_ref, b_ref, o_ref, win_ref, *,
                   stride, dilation, k_size, tl):
    """One (batch, L_out-tile) grid step.

    xm_ref : (1, C_in, TL*stride)       main input block (non-overlapping)
    xh_ref : (1, 1, C_in, halo_w)       right halo for this tile
    w_ref  : (C_out, K*C_in)            tap-fused weights
    b_ref  : (C_out, 1)                 bias column (zeros when use_bias=False)
    o_ref  : (1, C_out, TL)             output tile (L on lanes)
    win_ref: (C_in, TL*stride + halo_w) VMEM scratch: main block + halo
    """
    body = xm_ref.shape[2]
    # Assemble the halo'd window once per tile.
    win_ref[:, :body] = xm_ref[0]
    win_ref[:, body:] = xh_ref[0, 0]

    taps = []
    for k in range(k_size):  # K is small & static -> unrolled
        start = k * dilation
        if stride == 1:
            taps.append(win_ref[:, pl.ds(start, tl)])
        else:
            # Strided ref slice does the decimation at load time.
            taps.append(win_ref[:, pl.ds(start, tl, stride=stride)])
    xs = jnp.concatenate(taps, axis=0) if k_size > 1 else taps[0]  # (K*C_in, TL)

    acc = jnp.dot(w_ref[...], xs, preferred_element_type=jnp.float32)
    acc = acc + b_ref[...].astype(jnp.float32)  # (C_out, 1) broadcast over lanes
    o_ref[0] = acc.astype(o_ref.dtype)


def _round_up(a, b):
    return -(-a // b) * b


def meta_conv1d_forward(x, weight, bias=None, *, stride=1, padding=0,
                        dilation=1, groups=1):
    """Forward pass of MetaConv1dLayer: F.conv1d semantics, NCL in / NCL out."""
    if groups != 1:
        # TODO(synk): grouped conv1d (groups > 1) not implemented; module default is groups=1.
        raise NotImplementedError("groups != 1 not supported")

    stride = int(stride)
    padding = int(padding)
    dilation = int(dilation)

    n, c_in, l = x.shape
    c_out, c_in_w, k_size = weight.shape
    assert c_in_w == c_in, "in_channels mismatch"

    l_out = (l + 2 * padding - dilation * (k_size - 1) - 1) // stride + 1
    assert l_out > 0, "empty output"

    # Lane-dense tiling of L_out: one >=128-wide tile for short outputs,
    # 512-wide tiles otherwise; pad L_out up and slice the tail off afterwards.
    if l_out <= 1024:
        tl = _round_up(l_out, 128)
        l_out_p = tl
    else:
        tl = 512
        l_out_p = _round_up(l_out, tl)
    num_tiles = l_out_p // tl

    halo = (k_size - 1) * dilation
    halo_w = max(halo, 1)          # keep a >=1-wide halo array (unused if K==1)
    l_main = num_tiles * tl * stride
    l_total = l_main + halo_w

    # Zero-pad: `padding` on the left, fill to l_total on the right (covers the
    # conv padding, the L_out round-up, and the halo of the last tile).
    x_full = jnp.pad(x, ((0, 0), (0, 0), (padding, l_total - l - padding)))
    x_main = x_full[:, :, :l_main]

    # Per-tile right halo: columns [(j+1)*TL*stride, +halo_w) for tile j.
    starts = (jnp.arange(num_tiles) + 1) * (tl * stride)
    idx = starts[:, None] + jnp.arange(halo_w)[None, :]
    x_halo = jnp.transpose(x_full[:, :, idx], (0, 2, 1, 3))  # (N, T, C_in, halo_w)

    # Tap-fused weights: w2[o, k*C_in + i] = weight[o, i, k].
    w2 = jnp.transpose(weight, (0, 2, 1)).reshape(c_out, k_size * c_in)

    if bias is None:
        bias = jnp.zeros((c_out,), x.dtype)
    b2d = bias.reshape(c_out, 1).astype(x.dtype)

    kernel = functools.partial(_conv1d_kernel, stride=stride,
                               dilation=dilation, k_size=k_size, tl=tl)

    out_p = pl.pallas_call(
        kernel,
        out_shape=jax.ShapeDtypeStruct((n, c_out, l_out_p), x.dtype),
        grid=(n, num_tiles),
        in_specs=[
            pl.BlockSpec((1, c_in, tl * stride), lambda i, j: (i, 0, j)),
            pl.BlockSpec((1, 1, c_in, halo_w), lambda i, j: (i, j, 0, 0)),
            pl.BlockSpec((c_out, k_size * c_in), lambda i, j: (0, 0)),
            pl.BlockSpec((c_out, 1), lambda i, j: (0, 0)),
        ],
        out_specs=pl.BlockSpec((1, c_out, tl), lambda i, j: (i, 0, j)),
        scratch_shapes=[pltpu.VMEM((c_in, tl * stride + halo_w), x.dtype)],
        compiler_params=pltpu.CompilerParams(
            dimension_semantics=("parallel", "parallel")),
    )(x_main, x_halo, w2, b2d)

    return out_p[:, :, :l_out] if l_out_p != l_out else out_p


if __name__ == "__main__":
    key = jax.random.PRNGKey(0)
    k_x, k_w, k_b = jax.random.split(key, 3)

    # Shapes consistent with the module: MetaConv1dLayer(in_channels=4,
    # out_channels=8, kernel_size=3, stride=1, padding=1, use_bias=True).
    N, C_IN, L = 2, 4, 16
    C_OUT, K = 8, 3
    STRIDE, PADDING, DILATION, GROUPS = 1, 1, 1, 1

    x = jax.random.normal(k_x, (N, C_IN, L), dtype=jnp.float32)

    # Xavier-uniform init as in the module's __init__.
    fan_in, fan_out = C_IN * K, C_OUT * K
    bound = (6.0 / (fan_in + fan_out)) ** 0.5
    weight = jax.random.uniform(k_w, (C_OUT, C_IN, K), jnp.float32,
                                minval=-bound, maxval=bound)
    # Module initializes bias to zeros; use a small random bias so the bias
    # path is exercised non-trivially (module also accepts external params).
    bias = 0.1 * jax.random.normal(k_b, (C_OUT,), jnp.float32)

    out = meta_conv1d_forward(x, weight, bias, stride=STRIDE, padding=PADDING,
                              dilation=DILATION, groups=GROUPS)
    out = jax.block_until_ready(out)

    # Plain-JAX reference of F.conv1d.
    L_OUT = (L + 2 * PADDING - DILATION * (K - 1) - 1) // STRIDE + 1
    x_pad_ref = jnp.pad(x, ((0, 0), (0, 0), (PADDING, PADDING)))
    ref = jnp.zeros((N, C_OUT, L_OUT), jnp.float32)
    for k in range(K):
        sl = x_pad_ref[:, :, k * DILATION:
                       k * DILATION + (L_OUT - 1) * STRIDE + 1:STRIDE]
        ref = ref + jnp.einsum('oi,nil->nol', weight[:, :, k], sl)
    ref = ref + bias[None, :, None]

    assert out.shape == (N, C_OUT, L_OUT)
    assert jnp.allclose(out, ref, rtol=1e-4, atol=1e-4), "mismatch vs reference"

    print("KERNEL_OK")
</pallas_src>

<mosaic_0001>
module attributes {stable_mosaic.version = 11 : i64} {
  func.func @_conv1d_kernel(%arg0: i32, %arg1: i32, %arg2: memref<1x4x128xf32, #tpu.memory_space<vmem>>, %arg3: memref<1x1x4x2xf32, #tpu.memory_space<vmem>>, %arg4: memref<8x12xf32, #tpu.memory_space<vmem>>, %arg5: memref<8x1xf32, #tpu.memory_space<vmem>>, %arg6: memref<1x8x128xf32, #tpu.memory_space<vmem>>, %arg7: memref<4x130xf32, #tpu.memory_space<vmem>>) attributes {dimension_semantics = [#tpu.dimension_semantics<parallel>, #tpu.dimension_semantics<parallel>], iteration_bounds = array<i64: 2, 1>, scalar_prefetch = 0 : i64, scratch_operands = 1 : i64, tpu.core_type = #tpu.core_type<tc>, window_params = [{transform_indices = @transform_0, window_bounds = array<i64: 1, 4, 128>}, {transform_indices = @transform_1, window_bounds = array<i64: 1, 1, 4, 2>}, {pipeline_mode = #tpu.pipeline_mode<synchronous>, transform_indices = @transform_2, window_bounds = array<i64: 8, 12>}, {pipeline_mode = #tpu.pipeline_mode<synchronous>, transform_indices = @transform_3, window_bounds = array<i64: 8, 1>}, {transform_indices = @transform_4, window_bounds = array<i64: 1, 8, 128>}]} {
    %c0 = arith.constant 0 : index
    %c0_0 = arith.constant 0 : index
    %c0_1 = arith.constant 0 : index
    %0 = vector.load %arg2[%c0, %c0_0, %c0_1] : memref<1x4x128xf32, #tpu.memory_space<vmem>>, vector<1x4x128xf32>
    %1 = vector.shape_cast %0 : vector<1x4x128xf32> to vector<4x128xf32>
    %c0_2 = arith.constant 0 : index
    %c0_3 = arith.constant 0 : index
    %2 = vector.load %arg7[%c0_2, %c0_3] : memref<4x130xf32, #tpu.memory_space<vmem>>, vector<4x128xf32>
    tpu.vector_store %arg7[%c0_2, %c0_3], %1 {strides = array<i32>} : memref<4x130xf32, #tpu.memory_space<vmem>>, vector<4x128xf32>,
    %c0_4 = arith.constant 0 : index
    %c0_5 = arith.constant 0 : index
    %c0_6 = arith.constant 0 : index
    %c0_7 = arith.constant 0 : index
    %3 = vector.load %arg3[%c0_4, %c0_5, %c0_6, %c0_7] : memref<1x1x4x2xf32, #tpu.memory_space<vmem>>, vector<1x1x4x2xf32>
    %4 = vector.shape_cast %3 : vector<1x1x4x2xf32> to vector<4x2xf32>
    %c0_8 = arith.constant 0 : index
    %c128 = arith.constant 128 : index
    %5 = vector.load %arg7[%c0_8, %c128] : memref<4x130xf32, #tpu.memory_space<vmem>>, vector<4x2xf32>
    tpu.vector_store %arg7[%c0_8, %c128], %4 {strides = array<i32>} : memref<4x130xf32, #tpu.memory_space<vmem>>, vector<4x2xf32>,
    %c0_9 = arith.constant 0 : index
    %c0_10 = arith.constant 0 : index
    %6 = vector.load %arg7[%c0_9, %c0_10] : memref<4x130xf32, #tpu.memory_space<vmem>>, vector<4x128xf32>
    %c0_11 = arith.constant 0 : index
    %c1 = arith.constant 1 : index
    %7 = vector.load %arg7[%c0_11, %c1] : memref<4x130xf32, #tpu.memory_space<vmem>>, vector<4x128xf32>
    %c0_12 = arith.constant 0 : index
    %c2 = arith.constant 2 : index
    %8 = vector.load %arg7[%c0_12, %c2] : memref<4x130xf32, #tpu.memory_space<vmem>>, vector<4x128xf32>
    %9 = tpu.concatenate %6, %7, %8 in 0 : vector<4x128xf32>, vector<4x128xf32>, vector<4x128xf32> -> vector<12x128xf32>
    %c0_13 = arith.constant 0 : index
    %c0_14 = arith.constant 0 : index
    %10 = vector.load %arg4[%c0_13, %c0_14] : memref<8x12xf32, #tpu.memory_space<vmem>>, vector<8x12xf32>
    %cst = arith.constant dense<0.000000e+00> : vector<8x128xf32>
    %11 = tpu.matmul %10, %9, %cst {dimension_numbers = #tpu.dot_dimension_numbers<[1], [0], [0], [1], [0, 0, 1, 1], [], []>} : vector<8x12xf32>, vector<12x128xf32>, vector<8x128xf32> -> vector<8x128xf32>
    %c0_15 = arith.constant 0 : index
    %c0_16 = arith.constant 0 : index
    %12 = vector.load %arg5[%c0_15, %c0_16] : memref<8x1xf32, #tpu.memory_space<vmem>>, vector<8x1xf32>
    %13 = vector.broadcast %12 : vector<8x1xf32> to vector<8x128xf32>
    %14 = arith.addf %11, %13 : vector<8x128xf32>
    %c0_17 = arith.constant 0 : index
    %c0_18 = arith.constant 0 : index
    %c0_19 = arith.constant 0 : index
    %15 = vector.load %arg6[%c0_17, %c0_18, %c0_19] : memref<1x8x128xf32, #tpu.memory_space<vmem>>, vector<1x8x128xf32>
    %16 = vector.shape_cast %15 : vector<1x8x128xf32> to vector<8x128xf32>
    %17 = vector.shape_cast %14 : vector<8x128xf32> to vector<1x8x128xf32>
    tpu.vector_store %arg6[%c0_17, %c0_18, %c0_19], %17 {strides = array<i32>} : memref<1x8x128xf32, #tpu.memory_space<vmem>>, vector<1x8x128xf32>,
    return
  }
  func.func @transform_0(%arg0: i32, %arg1: i32) -> (i32, i32, i32) {
    %c0_i32 = arith.constant 0 : i32
    %c0_i32_0 = arith.constant 0 : i32
    return %arg0, %c0_i32, %arg1 : i32, i32, i32
  }
  func.func @transform_1(%arg0: i32, %arg1: i32) -> (i32, i32, i32, i32) {
    %c0_i32 = arith.constant 0 : i32
    %c0_i32_0 = arith.constant 0 : i32
    %c0_i32_1 = arith.constant 0 : i32
    return %arg0, %arg1, %c0_i32, %c0_i32_0 : i32, i32, i32, i32
  }
  func.func @transform_2(%arg0: i32, %arg1: i32) -> (i32, i32) {
    %c0_i32 = arith.constant 0 : i32
    %c0_i32_0 = arith.constant 0 : i32
    %c0_i32_1 = arith.constant 0 : i32
    return %c0_i32, %c0_i32_0 : i32, i32
  }
  func.func @transform_3(%arg0: i32, %arg1: i32) -> (i32, i32) {
    %c0_i32 = arith.constant 0 : i32
    %c0_i32_0 = arith.constant 0 : i32
    %c0_i32_1 = arith.constant 0 : i32
    return %c0_i32, %c0_i32_0 : i32, i32
  }
  func.func @transform_4(%arg0: i32, %arg1: i32) -> (i32, i32, i32) {
    %c0_i32 = arith.constant 0 : i32
    %c0_i32_0 = arith.constant 0 : i32
    return %arg0, %c0_i32, %arg1 : i32, i32, i32
  }
}

</mosaic_0001>

<llo_original>
// kernel: tpu_custom_call.1
$region0: #{tpu_custom_call.1}
  #allocation0 [shape = 'u32[]', space=smem, size = 0x4, offset = 0x4, fixed_abs, tag = 'smem constant byte address 0x4 - core index']
  #allocation1 [shape = 'u32[144,128]{1,0:T(1,128)}', space=vmem, size = 0x12000, scoped, tag = 'internal scratch']
  #allocation2 [shape = 'f32[4,130]{1,0:T(4,128)}', space=vmem, size = 0x1000, scoped, tag = 'scratch operand']
  %s0 = inlined_call_operand.vmem [shape: f32[2,4,128], index: 0, kind: input, shape index: {}]
  %s1 = inlined_call_operand.vmem [shape: f32[2,1,4,2], index: 1, kind: input, shape index: {}]
  %s2 = inlined_call_operand.vmem [shape: f32[8,12], index: 2, kind: input, shape index: {}]
  %s3 = inlined_call_operand.vmem [shape: f32[8,1], index: 3, kind: input, shape index: {}]
  %s4 = inlined_call_operand.hbm [shape: f32[2,8,128], index: 4, kind: output, shape index: {}]
  %s5 = sld [smem:[#allocation0]]
  $region49: #{tpu_custom_call.1} parent=0
    _
  %s7 = ssub.s32 1, %s5
  %s8 = scalar_select 0, %s7, %s5
  $region1: #{tpu_custom_call.1} parent=0
    #allocation3 [shape = 'u8[8192]{0}', space=vmem, size = 0x2000, scoped, tag = 'output window, operand 0']
    #allocation4 [shape = 's32[2]{0}', space=sflag, size = 0x8, scoped, tag = 'scoped memory for tpu_custom_call.1']
    %9 = vsyncpa [#allocation4], 0
    %s10 = scalar_lea.sflag [#allocation4], 1
    %11 = vsyncpa %s10, 0
    loop: start=0, step=1, limit=4
    $region2: #{tpu_custom_call.1} parent=1 // loop_pre_header
      _
    $region3: #{tpu_custom_call.1} parent=1 // loop_header
      %s13 = sphi 0, %s17
      %p14 = scmp.ge.s32.totalorder %s13, 4
      %s20 = sphi 0, %s32
      %s21 = sphi 0, %s28
      %s22 = sphi 0, %s20
      %s23 = sphi 0, %s21
      %s24 = sphi 0, %s22
      %s25 = sphi 0, %s23
      %s37 = sphi 0, %s39
      %s40 = sphi 0, %s37
      %s41 = sphi 0, %s40
      %s57 = sphi 0, %s41
      %s65 = sphi 0, %s67
      %s68 = sphi 0, %s65
      %s69 = sphi 0, %s68
      %s85 = sphi 0, %s69
      %s89 = sphi 0, %s89
      %s91 = sphi 0, %s89
      %s92 = sphi 0, %s91
      %s106 = sphi 0, %s92
      %s110 = sphi 0, %s110
      %s112 = sphi 0, %s110
      %s113 = sphi 0, %s112
      %s127 = sphi 0, %s113
      %s135 = sphi 0, %s137
      %s138 = sphi 0, %s135
      %s139 = sphi 0, %s138
      %s155 = sphi 0, %s139
    $region4: #{tpu_custom_call.1} parent=1 // loop_header_branch
      %16 = sbr.rel (%p14) target = $region8
    $region5: #{tpu_custom_call.1} parent=1 // loop_body
      %s18 = ssub.s32 %s13, 1
      %s19 = ssub.s32 %s13, 2
      %s26 = sadd.s32 1, %s21
      %p27 = scmp.ge.s32.totalorder %s26, 1
      %s28 = scalar_select %p27, 0, %s26
      %s29 = sadd.s32 1, %s20
      %s30 = scalar_select %p27, %s29, %s20
      %p31 = scmp.ge.s32.totalorder %s30, 2
      %s32 = scalar_select %p31, 0, %s30
      %s33 = ssub.s32 %s20, %s32
      %s34 = ssub.s32 %s21, %s28
      %s35 = sor.u32 %s33, %s34
      %p36 = scmp.eq.s32.totalorder %s35, 0
      %s38 = sadd.s32 %s37, 1
      %s39 = scalar_select %p36, %s37, %s38
      %p42 = pneg %p36
      %p43 = scmp.eq.s32.totalorder %s13, 1
      %p44 = por %p42, %p43
      %p45 = scmp.ne.s32.totalorder %s37, %s40
      %p46 = scmp.eq.s32.totalorder %s13, 0
      %p47 = por %p45, %p46
      %p48 = scmp.ne.s32.totalorder %s37, %s40
      %p49 = scmp.eq.s32.totalorder %s18, 1
      %p50 = por %p48, %p49
      %p51 = scmp.ne.s32.totalorder %s40, %s41
      %p52 = scmp.eq.s32.totalorder %s18, 0
      %p53 = por %p51, %p52
      %p54 = scmp.ne.s32.totalorder %s40, %s41
      %p55 = scmp.eq.s32.totalorder %s19, 1
      %p56 = por %p54, %p55
      %p58 = scmp.ne.s32.totalorder %s41, %s57
      %p59 = scmp.eq.s32.totalorder %s19, 0
      %p60 = por %p58, %p59
      %s61 = ssub.s32 %s20, %s32
      %s62 = ssub.s32 %s21, %s28
      %s63 = sor.u32 %s61, %s62
      %p64 = scmp.eq.s32.totalorder %s63, 0
      %s66 = sadd.s32 %s65, 1
      %s67 = scalar_select %p64, %s65, %s66
      %p70 = pneg %p64
      %p71 = scmp.eq.s32.totalorder %s13, 1
      %p72 = por %p70, %p71
      %p73 = scmp.ne.s32.totalorder %s65, %s68
      %p74 = scmp.eq.s32.totalorder %s13, 0
      %p75 = por %p73, %p74
      %p76 = scmp.ne.s32.totalorder %s65, %s68
      %p77 = scmp.eq.s32.totalorder %s18, 1
      %p78 = por %p76, %p77
      %p79 = scmp.ne.s32.totalorder %s68, %s69
      %p80 = scmp.eq.s32.totalorder %s18, 0
      %p81 = por %p79, %p80
      %p82 = scmp.ne.s32.totalorder %s68, %s69
      %p83 = scmp.eq.s32.totalorder %s19, 1
      %p84 = por %p82, %p83
      %p86 = scmp.ne.s32.totalorder %s69, %s85
      %p87 = scmp.eq.s32.totalorder %s19, 0
      %p88 = por %p86, %p87
      %s90 = sadd.s32 %s89, 1
      %p93 = scmp.eq.s32.totalorder %s13, 1
      %p94 = scmp.ne.s32.totalorder %s89, %s91
      %p95 = scmp.eq.s32.totalorder %s13, 0
      %p96 = por %p94, %p95
      %p97 = scmp.ne.s32.totalorder %s89, %s91
      %p98 = scmp.eq.s32.totalorder %s18, 1
      %p99 = por %p97, %p98
      %p100 = scmp.ne.s32.totalorder %s91, %s92
      %p101 = scmp.eq.s32.totalorder %s18, 0
      %p102 = por %p100, %p101
      %p103 = scmp.ne.s32.totalorder %s91, %s92
      %p104 = scmp.eq.s32.totalorder %s19, 1
      %p105 = por %p103, %p104
      %p107 = scmp.ne.s32.totalorder %s92, %s106
      %p108 = scmp.eq.s32.totalorder %s19, 0
      %p109 = por %p107, %p108
      %s111 = sadd.s32 %s110, 1
      %p114 = scmp.eq.s32.totalorder %s13, 1
      %p115 = scmp.ne.s32.totalorder %s110, %s112
      %p116 = scmp.eq.s32.totalorder %s13, 0
      %p117 = por %p115, %p116
      %p118 = scmp.ne.s32.totalorder %s110, %s112
      %p119 = scmp.eq.s32.totalorder %s18, 1
      %p120 = por %p118, %p119
      %p121 = scmp.ne.s32.totalorder %s112, %s113
      %p122 = scmp.eq.s32.totalorder %s18, 0
      %p123 = por %p121, %p122
      %p124 = scmp.ne.s32.totalorder %s112, %s113
      %p125 = scmp.eq.s32.totalorder %s19, 1
      %p126 = por %p124, %p125
      %p128 = scmp.ne.s32.totalorder %s113, %s127
      %p129 = scmp.eq.s32.totalorder %s19, 0
      %p130 = por %p128, %p129
      %s131 = ssub.s32 %s20, %s32
      %s132 = ssub.s32 %s21, %s28
      %s133 = sor.u32 %s131, %s132
      %p134 = scmp.eq.s32.totalorder %s133, 0
      %s136 = sadd.s32 %s135, 1
      %s137 = scalar_select %p134, %s135, %s136
      %p140 = pneg %p134
      %p141 = scmp.eq.s32.totalorder %s13, 1
      %p142 = por %p140, %p141
      %p143 = scmp.ne.s32.totalorder %s135, %s138
      %p144 = scmp.eq.s32.totalorder %s13, 0
      %p145 = por %p143, %p144
      %p146 = scmp.ne.s32.totalorder %s135, %s138
      %p147 = scmp.eq.s32.totalorder %s18, 1
      %p148 = por %p146, %p147
      %p149 = scmp.ne.s32.totalorder %s138, %s139
      %p150 = scmp.eq.s32.totalorder %s18, 0
      %p151 = por %p149, %p150
      %p152 = scmp.ne.s32.totalorder %s138, %s139
      %p153 = scmp.eq.s32.totalorder %s19, 1
      %p154 = por %p152, %p153
      %p156 = scmp.ne.s32.totalorder %s139, %s155
      %p157 = scmp.eq.s32.totalorder %s19, 0
      %p158 = por %p156, %p157
      %p159 = scmp.le.s32.totalorder 1, %s13
      %p160 = scmp.lt.s32.totalorder %s13, 3
      %p161 = pnand %p159, %p160
      %p162 = pneg %p161
      // Predicated region
      $region9: #{tpu_custom_call.1} parent=5 // pred_check
        _
      $region10: #{tpu_custom_call.1} parent=5 // pred_check_branch
        %164 = sbr.rel (%p161) target = $region12
      $region11: #{tpu_custom_call.1} parent=5 // pred_region
        %s165 = ssub.s32 %s13, 1
        // Predicated region
        $region13: #{tpu_custom_call.1} parent=11 // pred_check
          %p166 = pneg %p102
        $region14: #{tpu_custom_call.1} parent=11 // pred_check_branch
          %168 = sbr.rel (%p166) target = $region16
        $region15: #{tpu_custom_call.1} parent=11 // pred_region
          _
        $region16: #{tpu_custom_call.1} parent=11 // pred_fallthru
          _
        // Predicated region
        $region17: #{tpu_custom_call.1} parent=11 // pred_check
          %p169 = pneg %p123
        $region18: #{tpu_custom_call.1} parent=11 // pred_check_branch
          %171 = sbr.rel (%p169) target = $region20
        $region19: #{tpu_custom_call.1} parent=11 // pred_region
          _
        $region20: #{tpu_custom_call.1} parent=11 // pred_fallthru
          _
      $region12: #{tpu_custom_call.1} parent=5 // pred_fallthru
        _
      %p172 = scmp.lt.s32.totalorder %s13, 2
      // Predicated region
      $region21: #{tpu_custom_call.1} parent=5 // pred_check
        %p173 = pneg %p172
      $region22: #{tpu_custom_call.1} parent=5 // pred_check_branch
        %175 = sbr.rel (%p173) target = $region24
      $region23: #{tpu_custom_call.1} parent=5 // pred_region
        // Predicated region
        $region25: #{tpu_custom_call.1} parent=23 // pred_check
          %p176 = pneg %p47
        $region26: #{tpu_custom_call.1} parent=23 // pred_check_branch
          %178 = sbr.rel (%p176) target = $region28
        $region27: #{tpu_custom_call.1} parent=23 // pred_region
          %p179 = scmp.lt.s32.totalorder %s20, 1
          %s180 = scalar_select %p179, %s20, 1
          %p181 = scmp.lt.s32.totalorder %s21, 0
          %s182 = scalar_select %p181, %s21, 0
          %s183 = sadd.s32 %s182, %s180
          %s184 = smul.addr %s183, 4
          %s185 = scalar_lea.vmem %s0, %s184
        $region28: #{tpu_custom_call.1} parent=23 // pred_fallthru
          _
        // Predicated region
        $region29: #{tpu_custom_call.1} parent=23 // pred_check
          %p186 = pneg %p75
        $region30: #{tpu_custom_call.1} parent=23 // pred_check_branch
          %188 = sbr.rel (%p186) target = $region32
        $region31: #{tpu_custom_call.1} parent=23 // pred_region
          %p189 = scmp.lt.s32.totalorder %s20, 1
          %s190 = scalar_select %p189, %s20, 1
          %p191 = scmp.lt.s32.totalorder %s21, 0
          %s192 = scalar_select %p191, %s21, 0
          %s193 = sadd.s32 %s192, %s190
          %s194 = smul.addr %s193, 4
          %s195 = scalar_lea.vmem %s1, %s194
        $region32: #{tpu_custom_call.1} parent=23 // pred_fallthru
          _
      $region24: #{tpu_custom_call.1} parent=5 // pred_fallthru
        _
      %p196 = scmp.le.s32.totalorder 1, %s13
      %p197 = scmp.lt.s32.totalorder %s13, 3
      %p198 = pnand %p196, %p197
      %p199 = pneg %p198
      // Predicated region
      $region33: #{tpu_custom_call.1} parent=5 // pred_check
        _
      $region34: #{tpu_custom_call.1} parent=5 // pred_check_branch
        %201 = sbr.rel (%p198) target = $region36
      $region35: #{tpu_custom_call.1} parent=5 // pred_region
        %s202 = ssub.s32 %s13, 1
        %p203 = scmp.lt.s32.totalorder %s22, 1
        %s204 = scalar_select %p203, %s22, 1
        %p205 = scmp.lt.s32.totalorder %s23, 0
        %s206 = scalar_select %p205, %s23, 0
        %s207 = sadd.s32 %s206, %s204
        %s208 = smul.addr %s207, 4
        %s209 = scalar_lea.vmem %s0, %s208
        %p210 = pneg %p53
        %p211 = pneg %p50
        %p212 = scmp.lt.s32.totalorder %s22, 1
        %s213 = scalar_select %p212, %s22, 1
        %p214 = scmp.lt.s32.totalorder %s23, 0
        %s215 = scalar_select %p214, %s23, 0
        %s216 = sadd.s32 %s215, %s213
        %s217 = smul.addr %s216, 4
        %s218 = scalar_lea.vmem %s1, %s217
        %p219 = pneg %p81
        %p220 = pneg %p78
        %p221 = pneg %p102
        %p222 = pneg %p99
        %p223 = pneg %p123
        %p224 = pneg %p120
        %p225 = pneg %p151
        %p226 = pneg %p148
        %s227 = sand.u32 %s138, 1
        %s228 = scalar_lea.sflag [#allocation4], %s227
        %s229 = sand.u32 %s138, 1
        %s230 = smul.addr %s229, 8
        %s231 = scalar_lea.vmem [#allocation3], %s230
        %p232 = scmp.lt.s32.totalorder %s22, 1
        %s233 = scalar_select %p232, %s22, 1
        %p234 = scmp.lt.s32.totalorder %s23, 0
        %s235 = scalar_select %p234, %s23, 0
        %s236 = sadd.s32 %s235, %s233
        %s237 = smul.addr %s236, 4
        %s238 = scalar_lea.vmem %s0, %s237
        %p239 = scmp.lt.s32.totalorder %s22, 1
        %s240 = scalar_select %p239, %s22, 1
        %p241 = scmp.lt.s32.totalorder %s23, 0
        %s242 = scalar_select %p241, %s23, 0
        %s243 = sadd.s32 %s242, %s240
        %s244 = smul.addr %s243, 4
        %s245 = scalar_lea.vmem %s1, %s244
        %v246 = vld [vmem:[%s238] sm:$0xf]
        %247 = vst [vmem:[#allocation2] sm:$0xf] %v246
        %v248 = vld [vmem:[%s245] sm:$0xf]
        %vm249 = vcmask 11264
        %250 = vst.msk [vmem:[#allocation2 + $0x4] sm:$0xf] %vm249, %v248
        %v251 = vld [vmem:[#allocation2] sm:$0xf]
        %v252 = vld [vmem:[#allocation2] sm:$0xff]
        %v254 = vcombine.low %v252, %v252
        %255 = vrot.lane.b32.xlu0 %v254, 127
        %v256 = vpop.permute.xlu0 %255
        %257 = vrot.lane.b32.xlu0 %v252, 127
        %v258 = vpop.permute.xlu0 %257
        %vm259 = vcmask 1039360
        %v260 = vsel %vm259, %v256, %v258
        %v262 = vcombine.high %v252, %v252
        %263 = vrot.lane.b32.xlu0 %v252, 126
        %v264 = vpop.permute.xlu0 %263
        %265 = vrot.lane.b32.xlu0 %v262, 126
        %v266 = vpop.permute.xlu0 %265
        %vm267 = vcmask 1031168
        %v268 = vsel %vm267, %v264, %v266
        %vm269 = vcmask 1043456
        %v270 = vsel %vm269, %v251, %v260
        %v271 = vld [vmem:[%s2] sm:$0xff]
        %v272 = vld [vmem:[%s3] sm:$0xff]
        %274 = vset.pattern.permute.xlu0 0
        %275 = vperm.xlu0 %274, %v272
        %v276 = vpop.permute.xlu0 %275
        %vm278 = vcmask 97280
        %v280 = vsel %vm278, %v271, 0
        %v282 = vsel %vm269, %v268, 0
        %284 = vmatprep.subr.mxu0 0.0
        %285 = vmatpush1.msra.mxu0 %v270
        %286 = vmatprep.subr.mxu0 0.0
        %287 = vmatpush1.msra.mxu0 %v282
        %288 = vmatprep.subr.mxu0 0.0
        %289 = vmatpush1.msra.mxu0 0.0
        %290 = vmatprep.subr.mxu0 0.0
        %291 = vmatpush1.msra.mxu0 0.0
        %292 = vmatprep.subr.mxu0 0.0
        %293 = vmatpush1.msra.mxu0 0.0
        %294 = vmatprep.subr.mxu0 0.0
        %295 = vmatpush1.msra.mxu0 0.0
        %296 = vmatprep.subr.mxu0 0.0
        %297 = vmatpush1.msra.mxu0 0.0
        %298 = vmatprep.subr.mxu0 0.0
        %299 = vmatpush1.msra.mxu0 0.0
        %300 = vmatprep.subr.mxu0 0.0
        %301 = vmatpush1.msra.mxu0 0.0
        %302 = vmatprep.subr.mxu0 0.0
        %303 = vmatpush1.msra.mxu0 0.0
        %304 = vmatprep.subr.mxu0 0.0
        %305 = vmatpush1.msra.mxu0 0.0
        %306 = vmatprep.subr.mxu0 0.0
        %307 = vmatpush1.msra.mxu0 0.0
        %308 = vmatprep.subr.mxu0 0.0
        %309 = vmatpush1.msra.mxu0 0.0
        %310 = vmatprep.subr.mxu0 0.0
        %311 = vmatpush1.msra.mxu0 0.0
        %312 = vmatprep.subr.mxu0 0.0
        %313 = vmatpush1.msra.mxu0 0.0
        %314 = vmatprep.subr.mxu0 0.0
        %315 = vmatpush1.msra.mxu0 0.0
        %316 = vmatprep.subr.mxu0 0.0
        %317 = vmatpush1.msra.mxu0 0.0
        %318 = vmatprep.subr.mxu0 0.0
        %319 = vmatpush1.msra.mxu0 0.0
        %320 = vmatprep.subr.mxu0 0.0
        %321 = vmatpush1.msra.mxu0 0.0
        %322 = vmatprep.subr.mxu0 0.0
        %323 = vmatpush1.msra.mxu0 0.0
        %324 = vmatprep.subr.mxu0 0.0
        %325 = vmatpush1.msra.mxu0 0.0
        %326 = vmatprep.subr.mxu0 0.0
        %327 = vmatpush1.msra.mxu0 0.0
        %328 = vmatprep.subr.mxu0 0.0
        %329 = vmatpush1.msra.mxu0 0.0
        %330 = vmatprep.subr.mxu0 0.0
        %331 = vmatpush1.msra.mxu0 0.0
        %332 = vmatprep.subr.mxu0 0.0
        %333 = vmatpush1.msra.mxu0 0.0
        %334 = vmatprep.subr.mxu0 0.0
        %335 = vmatpush1.msra.mxu0 0.0
        %336 = vmatprep.subr.mxu0 0.0
        %337 = vmatpush1.msra.mxu0 0.0
        %338 = vmatprep.subr.mxu0 0.0
        %339 = vmatpush1.msra.mxu0 0.0
        %340 = vmatprep.subr.mxu0 0.0
        %341 = vmatpush1.msra.mxu0 0.0
        %342 = vmatprep.subr.mxu0 0.0
        %343 = vmatpush1.msra.mxu0 0.0
        %344 = vmatprep.subr.mxu0 0.0
        %345 = vmatpush1.msra.mxu0 0.0
        %346 = vmatprep.subr.mxu0 0.0
        %347 = vmatpush1.msra.mxu0 0.0
        %348 = vmatprep.mubr.f32.mxu0 0.0
        %349 = vmatmul.mubr.f32.gmra.mrb[0].mxu0 %v280
        %v350 = vpop.f32.mrb[0].mxu0
        %v351 = vadd.f32 %v276, %v350
        %v352 = vpop.f32.mrb[0].mxu0
        %353 = vdwg.mxu0
        %354 = vst [vmem:[%s231] sm:$0xff] %v351
        %s355 = sand.u32 %s138, 1
        %s356 = scalar_lea.sflag [#allocation4], %s355
        %s357 = sand.u32 %s138, 1
        %s358 = smul.addr %s357, 8
        %s359 = scalar_lea.vmem [#allocation3], %s358
        // Predicated region
        $region37: #{tpu_custom_call.1} parent=35 // pred_check
          %p360 = pneg %p148
        $region38: #{tpu_custom_call.1} parent=35 // pred_check_branch
          %362 = sbr.rel (%p360) target = $region40
        $region39: #{tpu_custom_call.1} parent=35 // pred_region
          %s364 = ssub.s32 128, 128
          %365 = vsyncadd %s356, %s364
          %s366 = sadd.s32 %s23, %s22
          %s367 = smul.addr %s366, 128
          %s368 = scalar_lea.hbm %s4, %s367
          %s370 = sshll.u32 %s359, 4
          %s371 = int_to_ptr.vmem [resolvable:$true] %s370
          %373 = dma.vmem_to_hbm [thread:$0]  %s371, 128, %s368, %s356
        $region40: #{tpu_custom_call.1} parent=35 // pred_fallthru
          _
      $region36: #{tpu_custom_call.1} parent=5 // pred_fallthru
        _
      %p374 = scmp.le.s32.totalorder 2, %s13
      // Predicated region
      $region41: #{tpu_custom_call.1} parent=5 // pred_check
        %p375 = pneg %p374
      $region42: #{tpu_custom_call.1} parent=5 // pred_check_branch
        %377 = sbr.rel (%p375) target = $region44
      $region43: #{tpu_custom_call.1} parent=5 // pred_region
        %s378 = ssub.s32 %s13, 2
        // Predicated region
        $region45: #{tpu_custom_call.1} parent=43 // pred_check
          %p379 = pneg %p154
        $region46: #{tpu_custom_call.1} parent=43 // pred_check_branch
          %381 = sbr.rel (%p379) target = $region48
        $region47: #{tpu_custom_call.1} parent=43 // pred_region
          %s382 = sand.u32 %s139, 1
          %s383 = scalar_lea.sflag [#allocation4], %s382
          %s384 = sand.u32 %s139, 1
          %s385 = smul.addr %s384, 8
          %s386 = scalar_lea.vmem [#allocation3], %s385
          %387 = dma.done %s383, 128
        $region48: #{tpu_custom_call.1} parent=43 // pred_fallthru
          _
      $region44: #{tpu_custom_call.1} parent=5 // pred_fallthru
        _
    $region6: #{tpu_custom_call.1} parent=1 // loop_footer
      %s17 = sadd.s32 1, %s13
    $region7: #{tpu_custom_call.1} parent=1 // loop_footer_branch
      %12 = sbr.rel target = $region3
    $region8: #{tpu_custom_call.1} parent=1 // loop_exit
      _
    %388 = vsyncpa [#allocation4], 1
    %s389 = scalar_lea.sflag [#allocation4], 1
    %390 = vsyncpa %s389, 1

</llo_original>
